<compile_context>
chip_gen: v6e
topology: v6e:2x2x1
jax: 0.10.0
libtpu: 0.0.40
codegen_flags: <defaults>
</compile_context>

<pallas_src>
import functools

import jax
import jax.numpy as jnp
from jax import lax
from jax.experimental import pallas as pl
from jax.experimental.pallas import tpu as pltpu


def _ds(start, size, stride=1):
    return pl.ds(start, size, stride) if stride > 1 else pl.ds(start, size)


def _pool_bn_kernel(*refs, pool_type, K, S, P, H, W, Ho, Wo, Lt, eps,
                    n_per_chan, use_fold):
    """One lane-tile block: separable (H then W) pooling with in-kernel padding
    plus fused training-mode BatchNorm.

    refs (in order):
      x_ref      (H,  W,  Lt)  input tile, lane = c*N + n  (NOT pre-padded)
      g_ref      (Lt, Lt)      block-diagonal group-sum/broadcast matrix [use_fold]
      gamma_ref  (1,  Lt)      BN gamma, repeated N times per channel
      beta_ref   (1,  Lt)      BN beta,  repeated N times per channel
      out_ref    (Ho, Wo, Lt)  output tile; also the VMEM staging buffer for the
                               pooled values (keeps vreg pressure bounded)
      hrow_ref   (1,  W,  Lt)  VMEM scratch: one H-pooled row
    """
    it = iter(refs)
    x_ref = next(it)
    g_ref = next(it) if use_fold else None
    gamma_ref = next(it)
    beta_ref = next(it)
    out_ref = next(it)
    hrow_ref = next(it)

    is_avg = pool_type == "avg"
    combine = (lambda a, b: a + b) if is_avg else jnp.maximum
    pad_val = 0.0 if is_avg else -jnp.inf

    # Static per-tap valid output-column ranges: W padding is handled here, so
    # the wrapper never materializes a padded copy of the input in HBM.
    w_taps = []
    for kw in range(K):
        j_lo = max(0, -((kw - P) // S))
        j_hi = min(Wo, (W - 1 + P - kw) // S + 1)
        if j_hi > j_lo:
            w_taps.append((j_lo, j_hi - j_lo, j_lo * S + kw - P))

    if is_avg:
        # count_include_pad=False divisor, computed in-kernel (per-row count *
        # per-column count); no (Ho, Wo, 1) side input, no lane-sparse operand.
        jj = lax.broadcasted_iota(jnp.int32, (1, Wo, 1), 1)
        cw = jnp.minimum(jj * S + (K - P), W) - jnp.maximum(jj * S - P, 0)
        inv_w = 1.0 / cw.astype(jnp.float32)                        # (1, Wo, 1)
    else:
        inv_w = None

    # ---------------- pooling: one output row per iteration ----------------
    def pool_row(i, carry):
        # H pass for output row i (border rows via clamp + select; interior
        # taps are statically known to be in range and skip the select).
        acc = jnp.full((1, W, Lt), pad_val, jnp.float32)
        for kh in range(K):
            r = i * S + kh - P
            always_valid = (kh - P >= 0) and ((Ho - 1) * S + kh - P <= H - 1)
            if always_valid:
                acc = combine(acc, x_ref[pl.ds(r, 1), :, :])
            else:
                tap = x_ref[pl.ds(jnp.clip(r, 0, H - 1), 1), :, :]
                valid = jnp.logical_and(r >= 0, r < H)
                acc = combine(acc, jnp.where(valid, tap, pad_val))
        hrow_ref[...] = acc

        # W pass (static valid column range per tap), accumulated in VMEM.
        out_ref[pl.ds(i, 1), :, :] = jnp.full((1, Wo, Lt), pad_val, jnp.float32)
        for j_lo, cnt, c0 in w_taps:
            src = hrow_ref[:, _ds(c0, cnt, S), :]
            cur = out_ref[pl.ds(i, 1), pl.ds(j_lo, cnt), :]
            out_ref[pl.ds(i, 1), pl.ds(j_lo, cnt), :] = combine(cur, src)

        if is_avg:
            ch = (jnp.minimum(i * S + (K - P), H)
                  - jnp.maximum(i * S - P, 0)).astype(jnp.float32)
            out_ref[pl.ds(i, 1), :, :] = (
                out_ref[pl.ds(i, 1), :, :] * ((1.0 / ch) * inv_w))
        return carry

    lax.fori_loop(0, Ho, pool_row, 0)

    # -------- BatchNorm2d (training-mode batch stats over (N, Ho, Wo)) ------
    # Pooled values live in out_ref (VMEM); reductions stream one (Wo, Lt) row
    # slab at a time, and the variance uses a centered second pass.
    inv_m = 1.0 / float(n_per_chan * Ho * Wo)

    def fold(v):  # group-sum + broadcast across the N lanes of each channel
        if use_fold:
            return jnp.dot(v, g_ref[...], preferred_element_type=jnp.float32)
        return v

    def row_sum(i, acc):
        return acc + out_ref[i]
    rsum = lax.fori_loop(0, Ho, row_sum, jnp.zeros((Wo, Lt), jnp.float32))
    mean = fold(jnp.sum(rsum, axis=0, keepdims=True)) * inv_m       # (1, Lt)

    def row_ssq(i, acc):
        d = out_ref[i] - mean
        return acc + d * d
    rssq = lax.fori_loop(0, Ho, row_ssq, jnp.zeros((Wo, Lt), jnp.float32))
    var = jnp.maximum(fold(jnp.sum(rssq, axis=0, keepdims=True)) * inv_m, 0.0)

    scale = gamma_ref[...] * lax.rsqrt(var + eps)                   # (1, Lt)
    shift = beta_ref[...] - mean * scale

    def apply_row(i, carry):
        out_ref[i] = out_ref[i] * scale + shift
        return carry
    lax.fori_loop(0, Ho, apply_row, 0)


def pool_bn(x_nchw, gamma, beta, *, pool_type="avg", kernel_size=3, stride=1,
            padding=1, eps=1e-5):
    """PoolBN forward.  x_nchw: (N, C, H, W), like the PyTorch module."""
    assert pool_type in ("avg", "max")
    N, C, H, W = x_nchw.shape
    K, S, P = int(kernel_size), int(stride), int(padding)
    assert K >= 1 and S >= 1 and 0 <= P <= K // 2, \
        "PyTorch pooling requires padding <= kernel_size // 2"
    Ho = (H + 2 * P - K) // S + 1
    Wo = (W + 2 * P - K) // S + 1
    assert Ho > 0 and Wo > 0
    L = C * N  # fused lane axis (lane-dense when C*N >= 128; for C*N < 128 the
    #            stores are lane-masked -- acceptable only for tiny shapes).

    # NCHW -> (H, W, C*N) with lane = c*N + n.
    # TODO(synk): fold this relayout (and the inverse on the output) into the
    # kernel's DMA layer so the op is a single HBM read + write end-to-end.
    x = x_nchw.astype(jnp.float32)
    x_hwl = jnp.transpose(x, (2, 3, 1, 0)).reshape(H, W, L)
    gamma_l = jnp.repeat(jnp.asarray(gamma, jnp.float32), N).reshape(1, L)
    beta_l = jnp.repeat(jnp.asarray(beta, jnp.float32), N).reshape(1, L)

    # ---- VMEM / generation-aware lane tiling (whole channels per tile) ----
    try:
        vmem_cap = int(pltpu.get_tpu_info().vmem_capacity_bytes)
    except Exception:
        vmem_cap = 128 * 1024 * 1024
    small_vmem = vmem_cap <= 64 * 1024 * 1024       # v7x-like: 2 TCs, 64 MiB VMEM
    budget = min(12 * 1024 * 1024 if small_vmem else 20 * 1024 * 1024,
                 vmem_cap // 5)

    use_fold = N > 1

    def est_bytes(t):
        lane = max(((t + 127) // 128) * 128, 128)          # VMEM lane padding
        b = 4 * lane * (2 * H * W + 2 * Ho * Wo + W + 32)  # x(x2)+out(x2)+hrow+g/b
        if use_fold:
            b += 2 * 4 * lane * max(((t + 7) // 8) * 8, 8)  # gmat, double-buffered
        return b

    cands = sorted({L} | {t for t in range(128, L, 128)
                          if L % t == 0 and t % N == 0})
    fitting = [t for t in cands if est_bytes(t) <= budget]
    split = [t for t in fitting if t < L]
    if small_vmem and split:
        Lt = max(split)            # >= 2 lane tiles -> both TensorCores busy
    elif fitting:
        Lt = max(fitting)
    else:
        Lt = min(cands)
    n_tiles = L // Lt

    blk_est = est_bytes(Lt)
    if blk_est > int(0.7 * vmem_cap):
        # TODO(synk): add H-tiling (halo rows + cross-block stat accumulation)
        # for very large feature maps instead of failing here.
        raise ValueError(
            f"PoolBN block estimate ({blk_est} B) exceeds the VMEM budget on "
            "this chip; spatial tiling is not implemented.")
    vmem_limit = int(min(0.75 * vmem_cap, max(24 * 1024 * 1024, 1.25 * blk_est)))

    inputs = [x_hwl]
    in_specs = [pl.BlockSpec((H, W, Lt), lambda l: (0, 0, l))]
    if use_fold:
        lane = jnp.arange(Lt)
        gmat = (lane[:, None] // N == lane[None, :] // N).astype(jnp.float32)
        inputs.append(gmat)
        in_specs.append(pl.BlockSpec((Lt, Lt), lambda l: (0, 0)))
    inputs += [gamma_l, beta_l]
    in_specs += [pl.BlockSpec((1, Lt), lambda l: (0, l)),
                 pl.BlockSpec((1, Lt), lambda l: (0, l))]

    kernel = functools.partial(
        _pool_bn_kernel, pool_type=pool_type, K=K, S=S, P=P, H=H, W=W,
        Ho=Ho, Wo=Wo, Lt=Lt, eps=float(eps), n_per_chan=N, use_fold=use_fold)

    cost = pl.CostEstimate(
        flops=(2 * K + 10) * N * C * Ho * Wo,
        transcendentals=2 * L + ((Ho + Wo) if pool_type == "avg" else 0),
        bytes_accessed=4 * (H * W * L + Ho * Wo * L + 2 * L))

    grid_spec = pltpu.PrefetchScalarGridSpec(
        num_scalar_prefetch=0,
        grid=(n_tiles,),
        in_specs=in_specs,
        out_specs=pl.BlockSpec((Ho, Wo, Lt), lambda l: (0, 0, l)),
        scratch_shapes=[pltpu.VMEM((1, W, Lt), jnp.float32)],
    )

    out_hwl = pl.pallas_call(
        kernel,
        out_shape=jax.ShapeDtypeStruct((Ho, Wo, L), jnp.float32),
        grid_spec=grid_spec,
        compiler_params=pltpu.CompilerParams(
            dimension_semantics=("parallel",),
            vmem_limit_bytes=vmem_limit),
        cost_estimate=cost,
    )(*inputs)

    # (Ho, Wo, C*N) -> (N, C, Ho, Wo)
    return jnp.transpose(out_hwl.reshape(Ho, Wo, C, N), (3, 2, 0, 1))


def _ref_pool_bn(x, gamma, beta, pool_type, K, S, P, eps=1e-5):
    """Pure-JAX reference matching PyTorch semantics (NCHW)."""
    N, C, H, W = x.shape
    x = x.astype(jnp.float32)
    if pool_type == "max":
        pooled = lax.reduce_window(
            x, -jnp.inf, lax.max, (1, 1, K, K), (1, 1, S, S),
            padding=((0, 0), (0, 0), (P, P), (P, P)))
    else:
        s = lax.reduce_window(
            x, 0.0, lax.add, (1, 1, K, K), (1, 1, S, S),
            padding=((0, 0), (0, 0), (P, P), (P, P)))
        ones = jnp.ones_like(x)
        cnt = lax.reduce_window(
            ones, 0.0, lax.add, (1, 1, K, K), (1, 1, S, S),
            padding=((0, 0), (0, 0), (P, P), (P, P)))
        pooled = s / cnt
    mean = jnp.mean(pooled, axis=(0, 2, 3), keepdims=True)
    var = jnp.mean((pooled - mean) ** 2, axis=(0, 2, 3), keepdims=True)
    y = (pooled - mean) * lax.rsqrt(var + eps)
    return y * gamma.reshape(1, C, 1, 1) + beta.reshape(1, C, 1, 1)


if __name__ == "__main__":
    key = jax.random.PRNGKey(0)
    kx, kg, kb = jax.random.split(key, 3)

    N, C, H, W = 2, 4, 16, 16          # small shapes consistent with the module
    x = jax.random.normal(kx, (N, C, H, W), jnp.float32)
    gamma = 1.0 + 0.1 * jax.random.normal(kg, (C,), jnp.float32)
    beta = 0.1 * jax.random.normal(kb, (C,), jnp.float32)

    configs = [(3, 1, 1),   # typical DARTS PoolBN (normal cell)
               (3, 2, 1),   # reduction-cell stride-2 variant
               (2, 2, 0)]   # no-padding variant
    for pool_type in ("avg", "max"):
        for (K, S, P) in configs:
            out = pool_bn(x, gamma, beta, pool_type=pool_type,
                          kernel_size=K, stride=S, padding=P)
            out = jax.block_until_ready(out)
            ref = _ref_pool_bn(x, gamma, beta, pool_type, K, S, P)
            assert out.shape == ref.shape
            err = float(jnp.max(jnp.abs(out - ref)))
            assert err < 1e-3, f"{pool_type} K={K} S={S} P={P}: max err {err}"

    print("KERNEL_OK")
</pallas_src>

<mosaic_0001>
module attributes {stable_mosaic.version = 11 : i64} {
  func.func @_pool_bn_kernel(%arg0: i32, %arg1: memref<16x16x8xf32, #tpu.memory_space<vmem>>, %arg2: memref<8x8xf32, #tpu.memory_space<vmem>>, %arg3: memref<1x8xf32, #tpu.memory_space<vmem>>, %arg4: memref<1x8xf32, #tpu.memory_space<vmem>>, %arg5: memref<16x16x8xf32, #tpu.memory_space<vmem>>, %arg6: memref<1x16x8xf32, #tpu.memory_space<vmem>>) attributes {dimension_semantics = [#tpu.dimension_semantics<parallel>], iteration_bounds = array<i64: 1>, scalar_prefetch = 0 : i64, scratch_operands = 1 : i64, tpu.core_type = #tpu.core_type<tc>, window_params = [{transform_indices = @transform_0, window_bounds = array<i64: 16, 16, 8>}, {pipeline_mode = #tpu.pipeline_mode<synchronous>, transform_indices = @transform_1, window_bounds = array<i64: 8, 8>}, {transform_indices = @transform_2, window_bounds = array<i64: 1, 8>}, {transform_indices = @transform_3, window_bounds = array<i64: 1, 8>}, {transform_indices = @transform_4, window_bounds = array<i64: 16, 16, 8>}]} {
    %0 = tpu.iota {dimensions = array<i32: 1>} : vector<1x16x1xi32>
    %c1_i32 = arith.constant 1 : i32
    %1 = vector.broadcast %c1_i32 : i32 to vector<1x16x1xi32>
    %2 = arith.muli %0, %1 : vector<1x16x1xi32>
    %c2_i32 = arith.constant 2 : i32
    %3 = vector.broadcast %c2_i32 : i32 to vector<1x16x1xi32>
    %4 = arith.addi %2, %3 : vector<1x16x1xi32>
    %c16_i32 = arith.constant 16 : i32
    %5 = vector.broadcast %c16_i32 : i32 to vector<1x16x1xi32>
    %6 = arith.minsi %4, %5 : vector<1x16x1xi32>
    %c1_i32_0 = arith.constant 1 : i32
    %7 = vector.broadcast %c1_i32_0 : i32 to vector<1x16x1xi32>
    %8 = arith.muli %0, %7 : vector<1x16x1xi32>
    %c1_i32_1 = arith.constant 1 : i32
    %9 = vector.broadcast %c1_i32_1 : i32 to vector<1x16x1xi32>
    %10 = arith.subi %8, %9 : vector<1x16x1xi32>
    %c0_i32 = arith.constant 0 : i32
    %11 = vector.broadcast %c0_i32 : i32 to vector<1x16x1xi32>
    %12 = arith.maxsi %10, %11 : vector<1x16x1xi32>
    %13 = arith.subi %6, %12 : vector<1x16x1xi32>
    %14 = arith.sitofp %13 : vector<1x16x1xi32> to vector<1x16x1xf32>
    %cst = arith.constant 1.000000e+00 : f32
    %15 = vector.broadcast %cst : f32 to vector<1x16x1xf32>
    %16 = arith.divf %15, %14 : vector<1x16x1xf32>
    %c0_i32_2 = arith.constant 0 : i32
    %c16_i32_3 = arith.constant 16 : i32
    %17 = arith.addi %c0_i32_2, %c16_i32_3 : i32
    %c1_i32_4 = arith.constant 1 : i32
    scf.for %arg7 = %c0_i32_2 to %17 step %c1_i32_4  : i32 {
      %cst_35 = arith.constant 0.000000e+00 : f32
      %47 = vector.broadcast %cst_35 : f32 to vector<1x16x8xf32>
      %c1_i32_36 = arith.constant 1 : i32
      %48 = arith.muli %arg7, %c1_i32_36 : i32
      %c0_i32_37 = arith.constant 0 : i32
      %49 = arith.addi %48, %c0_i32_37 : i32
      %c1_i32_38 = arith.constant 1 : i32
      %50 = arith.subi %49, %c1_i32_38 : i32
      %c0_i32_39 = arith.constant 0 : i32
      %c15_i32 = arith.constant 15 : i32
      %51 = arith.maxsi %c0_i32_39, %50 : i32
      %52 = arith.minsi %c15_i32, %51 : i32
      %53 = arith.index_cast %52 : i32 to index
      %c0_40 = arith.constant 0 : index
      %c0_41 = arith.constant 0 : index
      %54 = vector.load %arg1[%53, %c0_40, %c0_41] : memref<16x16x8xf32, #tpu.memory_space<vmem>>, vector<1x16x8xf32>
      %c0_i32_42 = arith.constant 0 : i32
      %55 = arith.cmpi sge, %50, %c0_i32_42 : i32
      %c16_i32_43 = arith.constant 16 : i32
      %56 = arith.cmpi slt, %50, %c16_i32_43 : i32
      %57 = arith.andi %55, %56 : i1
      %cst_44 = arith.constant 0.000000e+00 : f32
      %58 = vector.broadcast %cst_44 : f32 to vector<1x16x8xf32>
      %59 = arith.select %57, %54, %58 : vector<1x16x8xf32>
      %60 = arith.addf %47, %59 : vector<1x16x8xf32>
      %c1_i32_45 = arith.constant 1 : i32
      %61 = arith.muli %arg7, %c1_i32_45 : i32
      %c1_i32_46 = arith.constant 1 : i32
      %62 = arith.addi %61, %c1_i32_46 : i32
      %c1_i32_47 = arith.constant 1 : i32
      %63 = arith.subi %62, %c1_i32_47 : i32
      %64 = arith.index_cast %63 : i32 to index
      %c0_48 = arith.constant 0 : index
      %c0_49 = arith.constant 0 : index
      %65 = vector.load %arg1[%64, %c0_48, %c0_49] : memref<16x16x8xf32, #tpu.memory_space<vmem>>, vector<1x16x8xf32>
      %66 = arith.addf %60, %65 : vector<1x16x8xf32>
      %c1_i32_50 = arith.constant 1 : i32
      %67 = arith.muli %arg7, %c1_i32_50 : i32
      %c2_i32_51 = arith.constant 2 : i32
      %68 = arith.addi %67, %c2_i32_51 : i32
      %c1_i32_52 = arith.constant 1 : i32
      %69 = arith.subi %68, %c1_i32_52 : i32
      %c0_i32_53 = arith.constant 0 : i32
      %c15_i32_54 = arith.constant 15 : i32
      %70 = arith.maxsi %c0_i32_53, %69 : i32
      %71 = arith.minsi %c15_i32_54, %70 : i32
      %72 = arith.index_cast %71 : i32 to index
      %c0_55 = arith.constant 0 : index
      %c0_56 = arith.constant 0 : index
      %73 = vector.load %arg1[%72, %c0_55, %c0_56] : memref<16x16x8xf32, #tpu.memory_space<vmem>>, vector<1x16x8xf32>
      %c0_i32_57 = arith.constant 0 : i32
      %74 = arith.cmpi sge, %69, %c0_i32_57 : i32
      %c16_i32_58 = arith.constant 16 : i32
      %75 = arith.cmpi slt, %69, %c16_i32_58 : i32
      %76 = arith.andi %74, %75 : i1
      %cst_59 = arith.constant 0.000000e+00 : f32
      %77 = vector.broadcast %cst_59 : f32 to vector<1x16x8xf32>
      %78 = arith.select %76, %73, %77 : vector<1x16x8xf32>
      %79 = arith.addf %66, %78 : vector<1x16x8xf32>
      %c0_60 = arith.constant 0 : index
      %c0_61 = arith.constant 0 : index
      %c0_62 = arith.constant 0 : index
      %80 = vector.load %arg6[%c0_60, %c0_61, %c0_62] : memref<1x16x8xf32, #tpu.memory_space<vmem>>, vector<1x16x8xf32>
      tpu.vector_store %arg6[%c0_60, %c0_61, %c0_62], %79 {strides = array<i32>} : memref<1x16x8xf32, #tpu.memory_space<vmem>>, vector<1x16x8xf32>,
      %cst_63 = arith.constant 0.000000e+00 : f32
      %81 = vector.broadcast %cst_63 : f32 to vector<1x16x8xf32>
      %82 = arith.index_cast %arg7 : i32 to index
      %c0_64 = arith.constant 0 : index
      %c0_65 = arith.constant 0 : index
      %83 = vector.load %arg5[%82, %c0_64, %c0_65] : memref<16x16x8xf32, #tpu.memory_space<vmem>>, vector<1x16x8xf32>
      tpu.vector_store %arg5[%82, %c0_64, %c0_65], %81 {strides = array<i32>} : memref<16x16x8xf32, #tpu.memory_space<vmem>>, vector<1x16x8xf32>,
      %c0_66 = arith.constant 0 : index
      %c0_67 = arith.constant 0 : index
      %c0_68 = arith.constant 0 : index
      %84 = vector.load %arg6[%c0_66, %c0_67, %c0_68] : memref<1x16x8xf32, #tpu.memory_space<vmem>>, vector<1x15x8xf32>
      %85 = arith.index_cast %arg7 : i32 to index
      %c1 = arith.constant 1 : index
      %c0_69 = arith.constant 0 : index
      %86 = vector.load %arg5[%85, %c1, %c0_69] : memref<16x16x8xf32, #tpu.memory_space<vmem>>, vector<1x15x8xf32>
      %87 = arith.addf %86, %84 : vector<1x15x8xf32>
      %88 = arith.index_cast %arg7 : i32 to index
      %c1_70 = arith.constant 1 : index
      %c0_71 = arith.constant 0 : index
      %89 = vector.load %arg5[%88, %c1_70, %c0_71] : memref<16x16x8xf32, #tpu.memory_space<vmem>>, vector<1x15x8xf32>
      tpu.vector_store %arg5[%88, %c1_70, %c0_71], %87 {strides = array<i32>} : memref<16x16x8xf32, #tpu.memory_space<vmem>>, vector<1x15x8xf32>,
      %c0_72 = arith.constant 0 : index
      %c0_73 = arith.constant 0 : index
      %c0_74 = arith.constant 0 : index
      %90 = vector.load %arg6[%c0_72, %c0_73, %c0_74] : memref<1x16x8xf32, #tpu.memory_space<vmem>>, vector<1x16x8xf32>
      %91 = arith.index_cast %arg7 : i32 to index
      %c0_75 = arith.constant 0 : index
      %c0_76 = arith.constant 0 : index
      %92 = vector.load %arg5[%91, %c0_75, %c0_76] : memref<16x16x8xf32, #tpu.memory_space<vmem>>, vector<1x16x8xf32>
      %93 = arith.addf %92, %90 : vector<1x16x8xf32>
      %94 = arith.index_cast %arg7 : i32 to index
      %c0_77 = arith.constant 0 : index
      %c0_78 = arith.constant 0 : index
      %95 = vector.load %arg5[%94, %c0_77, %c0_78] : memref<16x16x8xf32, #tpu.memory_space<vmem>>, vector<1x16x8xf32>
      tpu.vector_store %arg5[%94, %c0_77, %c0_78], %93 {strides = array<i32>} : memref<16x16x8xf32, #tpu.memory_space<vmem>>, vector<1x16x8xf32>,
      %c0_79 = arith.constant 0 : index
      %c1_80 = arith.constant 1 : index
      %c0_81 = arith.constant 0 : index
      %96 = vector.load %arg6[%c0_79, %c1_80, %c0_81] : memref<1x16x8xf32, #tpu.memory_space<vmem>>, vector<1x15x8xf32>
      %97 = arith.index_cast %arg7 : i32 to index
      %c0_82 = arith.constant 0 : index
      %c0_83 = arith.constant 0 : index
      %98 = vector.load %arg5[%97, %c0_82, %c0_83] : memref<16x16x8xf32, #tpu.memory_space<vmem>>, vector<1x15x8xf32>
      %99 = arith.addf %98, %96 : vector<1x15x8xf32>
      %100 = arith.index_cast %arg7 : i32 to index
      %c0_84 = arith.constant 0 : index
      %c0_85 = arith.constant 0 : index
      %101 = vector.load %arg5[%100, %c0_84, %c0_85] : memref<16x16x8xf32, #tpu.memory_space<vmem>>, vector<1x15x8xf32>
      tpu.vector_store %arg5[%100, %c0_84, %c0_85], %99 {strides = array<i32>} : memref<16x16x8xf32, #tpu.memory_space<vmem>>, vector<1x15x8xf32>,
      %c1_i32_86 = arith.constant 1 : i32
      %102 = arith.muli %arg7, %c1_i32_86 : i32
      %c2_i32_87 = arith.constant 2 : i32
      %103 = arith.addi %102, %c2_i32_87 : i32
      %c16_i32_88 = arith.constant 16 : i32
      %104 = arith.minsi %103, %c16_i32_88 : i32
      %c1_i32_89 = arith.constant 1 : i32
      %105 = arith.muli %arg7, %c1_i32_89 : i32
      %c1_i32_90 = arith.constant 1 : i32
      %106 = arith.subi %105, %c1_i32_90 : i32
      %c0_i32_91 = arith.constant 0 : i32
      %107 = arith.maxsi %106, %c0_i32_91 : i32
      %108 = arith.subi %104, %107 : i32
      %109 = arith.sitofp %108 : i32 to f32
      %110 = arith.index_cast %arg7 : i32 to index
      %c0_92 = arith.constant 0 : index
      %c0_93 = arith.constant 0 : index
      %111 = vector.load %arg5[%110, %c0_92, %c0_93] : memref<16x16x8xf32, #tpu.memory_space<vmem>>, vector<1x16x8xf32>
      %cst_94 = arith.constant 1.000000e+00 : f32
      %112 = arith.divf %cst_94, %109 : f32
      %113 = vector.broadcast %112 : f32 to vector<1x16x1xf32>
      %114 = arith.mulf %113, %16 : vector<1x16x1xf32>
      %115 = vector.broadcast %114 : vector<1x16x1xf32> to vector<1x16x8xf32>
      %116 = arith.mulf %111, %115 : vector<1x16x8xf32>
      %117 = arith.index_cast %arg7 : i32 to index
      %c0_95 = arith.constant 0 : index
      %c0_96 = arith.constant 0 : index
      %118 = vector.load %arg5[%117, %c0_95, %c0_96] : memref<16x16x8xf32, #tpu.memory_space<vmem>>, vector<1x16x8xf32>
      tpu.vector_store %arg5[%117, %c0_95, %c0_96], %116 {strides = array<i32>} : memref<16x16x8xf32, #tpu.memory_space<vmem>>, vector<1x16x8xf32>,
    }
    %c16_i32_5 = arith.constant 16 : i32
    %cst_6 = arith.constant 0.000000e+00 : f32
    %18 = vector.broadcast %cst_6 : f32 to vector<16x8xf32>
    %c0_i32_7 = arith.constant 0 : i32
    %c16_i32_8 = arith.constant 16 : i32
    %19 = arith.addi %c0_i32_7, %c16_i32_8 : i32
    %c1_i32_9 = arith.constant 1 : i32
    %20 = scf.for %arg7 = %c0_i32_7 to %19 step %c1_i32_9 iter_args(%arg8 = %18) -> (vector<16x8xf32>)  : i32 {
      %47 = arith.index_cast %arg7 : i32 to index
      %c0_35 = arith.constant 0 : index
      %c0_36 = arith.constant 0 : index
      %48 = vector.load %arg5[%47, %c0_35, %c0_36] : memref<16x16x8xf32, #tpu.memory_space<vmem>>, vector<1x16x8xf32>
      %49 = vector.shape_cast %48 : vector<1x16x8xf32> to vector<16x8xf32>
      %50 = arith.addf %arg8, %49 : vector<16x8xf32>
      scf.yield %50 : vector<16x8xf32>
    }
    %c16_i32_10 = arith.constant 16 : i32
    %cst_11 = arith.constant dense<0.000000e+00> : vector<8xf32>
    %21 = vector.multi_reduction <add>, %20, %cst_11 [0] : vector<16x8xf32> to vector<8xf32>
    %22 = vector.shape_cast %21 : vector<8xf32> to vector<1x8xf32>
    %c0 = arith.constant 0 : index
    %c0_12 = arith.constant 0 : index
    %23 = vector.load %arg2[%c0, %c0_12] : memref<8x8xf32, #tpu.memory_space<vmem>>, vector<8x8xf32>
    %cst_13 = arith.constant dense<0.000000e+00> : vector<1x8xf32>
    %24 = tpu.matmul %22, %23, %cst_13 {dimension_numbers = #tpu.dot_dimension_numbers<[1], [0], [0], [1], [0, 0, 1, 1], [], []>} : vector<1x8xf32>, vector<8x8xf32>, vector<1x8xf32> -> vector<1x8xf32>
    %cst_14 = arith.constant 0.001953125 : f32
    %25 = vector.broadcast %cst_14 : f32 to vector<1x8xf32>
    %26 = arith.mulf %24, %25 : vector<1x8xf32>
    %cst_15 = arith.constant 0.000000e+00 : f32
    %27 = vector.broadcast %cst_15 : f32 to vector<16x8xf32>
    %c0_i32_16 = arith.constant 0 : i32
    %c16_i32_17 = arith.constant 16 : i32
    %28 = arith.addi %c0_i32_16, %c16_i32_17 : i32
    %c1_i32_18 = arith.constant 1 : i32
    %29 = scf.for %arg7 = %c0_i32_16 to %28 step %c1_i32_18 iter_args(%arg8 = %27) -> (vector<16x8xf32>)  : i32 {
      %47 = arith.index_cast %arg7 : i32 to index
      %c0_35 = arith.constant 0 : index
      %c0_36 = arith.constant 0 : index
      %48 = vector.load %arg5[%47, %c0_35, %c0_36] : memref<16x16x8xf32, #tpu.memory_space<vmem>>, vector<1x16x8xf32>
      %49 = vector.shape_cast %48 : vector<1x16x8xf32> to vector<16x8xf32>
      %50 = vector.broadcast %26 : vector<1x8xf32> to vector<16x8xf32>
      %51 = arith.subf %49, %50 : vector<16x8xf32>
      %52 = arith.mulf %51, %51 : vector<16x8xf32>
      %53 = arith.addf %arg8, %52 : vector<16x8xf32>
      scf.yield %53 : vector<16x8xf32>
    }
    %c16_i32_19 = arith.constant 16 : i32
    %cst_20 = arith.constant dense<0.000000e+00> : vector<8xf32>
    %30 = vector.multi_reduction <add>, %29, %cst_20 [0] : vector<16x8xf32> to vector<8xf32>
    %31 = vector.shape_cast %30 : vector<8xf32> to vector<1x8xf32>
    %c0_21 = arith.constant 0 : index
    %c0_22 = arith.constant 0 : index
    %32 = vector.load %arg2[%c0_21, %c0_22] : memref<8x8xf32, #tpu.memory_space<vmem>>, vector<8x8xf32>
    %cst_23 = arith.constant dense<0.000000e+00> : vector<1x8xf32>
    %33 = tpu.matmul %31, %32, %cst_23 {dimension_numbers = #tpu.dot_dimension_numbers<[1], [0], [0], [1], [0, 0, 1, 1], [], []>} : vector<1x8xf32>, vector<8x8xf32>, vector<1x8xf32> -> vector<1x8xf32>
    %cst_24 = arith.constant 0.001953125 : f32
    %34 = vector.broadcast %cst_24 : f32 to vector<1x8xf32>
    %35 = arith.mulf %33, %34 : vector<1x8xf32>
    %cst_25 = arith.constant 0.000000e+00 : f32
    %36 = vector.broadcast %cst_25 : f32 to vector<1x8xf32>
    %37 = arith.maximumf %35, %36 : vector<1x8xf32>
    %c0_26 = arith.constant 0 : index
    %c0_27 = arith.constant 0 : index
    %38 = vector.load %arg3[%c0_26, %c0_27] : memref<1x8xf32, #tpu.memory_space<vmem>>, vector<1x8xf32>
    %cst_28 = arith.constant 9.99999974E-6 : f32
    %39 = vector.broadcast %cst_28 : f32 to vector<1x8xf32>
    %40 = arith.addf %37, %39 : vector<1x8xf32>
    %41 = math.rsqrt %40 : vector<1x8xf32>
    %42 = arith.mulf %38, %41 : vector<1x8xf32>
    %c0_29 = arith.constant 0 : index
    %c0_30 = arith.constant 0 : index
    %43 = vector.load %arg4[%c0_29, %c0_30] : memref<1x8xf32, #tpu.memory_space<vmem>>, vector<1x8xf32>
    %44 = arith.mulf %26, %42 : vector<1x8xf32>
    %45 = arith.subf %43, %44 : vector<1x8xf32>
    %c0_i32_31 = arith.constant 0 : i32
    %c16_i32_32 = arith.constant 16 : i32
    %46 = arith.addi %c0_i32_31, %c16_i32_32 : i32
    %c1_i32_33 = arith.constant 1 : i32
    scf.for %arg7 = %c0_i32_31 to %46 step %c1_i32_33  : i32 {
      %47 = arith.index_cast %arg7 : i32 to index
      %c0_35 = arith.constant 0 : index
      %c0_36 = arith.constant 0 : index
      %48 = vector.load %arg5[%47, %c0_35, %c0_36] : memref<16x16x8xf32, #tpu.memory_space<vmem>>, vector<1x16x8xf32>
      %49 = vector.shape_cast %48 : vector<1x16x8xf32> to vector<16x8xf32>
      %50 = vector.broadcast %42 : vector<1x8xf32> to vector<16x8xf32>
      %51 = arith.mulf %49, %50 : vector<16x8xf32>
      %52 = vector.broadcast %45 : vector<1x8xf32> to vector<16x8xf32>
      %53 = arith.addf %51, %52 : vector<16x8xf32>
      %54 = arith.index_cast %arg7 : i32 to index
      %c0_37 = arith.constant 0 : index
      %c0_38 = arith.constant 0 : index
      %55 = vector.load %arg5[%54, %c0_37, %c0_38] : memref<16x16x8xf32, #tpu.memory_space<vmem>>, vector<1x16x8xf32>
      %56 = vector.shape_cast %55 : vector<1x16x8xf32> to vector<16x8xf32>
      %57 = vector.shape_cast %53 : vector<16x8xf32> to vector<1x16x8xf32>
      tpu.vector_store %arg5[%54, %c0_37, %c0_38], %57 {strides = array<i32>} : memref<16x16x8xf32, #tpu.memory_space<vmem>>, vector<1x16x8xf32>,
    }
    %c16_i32_34 = arith.constant 16 : i32
    return
  }
  func.func @transform_0(%arg0: i32) -> (i32, i32, i32) {
    %c0_i32 = arith.constant 0 : i32
    %c0_i32_0 = arith.constant 0 : i32
    %c0_i32_1 = arith.constant 0 : i32
    return %c0_i32, %c0_i32_0, %arg0 : i32, i32, i32
  }
  func.func @transform_1(%arg0: i32) -> (i32, i32) {
    %c0_i32 = arith.constant 0 : i32
    %c0_i32_0 = arith.constant 0 : i32
    %c0_i32_1 = arith.constant 0 : i32
    return %c0_i32, %c0_i32_0 : i32, i32
  }
  func.func @transform_2(%arg0: i32) -> (i32, i32) {
    %c0_i32 = arith.constant 0 : i32
    %c0_i32_0 = arith.constant 0 : i32
    return %c0_i32, %arg0 : i32, i32
  }
  func.func @transform_3(%arg0: i32) -> (i32, i32) {
    %c0_i32 = arith.constant 0 : i32
    %c0_i32_0 = arith.constant 0 : i32
    return %c0_i32, %arg0 : i32, i32
  }
  func.func @transform_4(%arg0: i32) -> (i32, i32, i32) {
    %c0_i32 = arith.constant 0 : i32
    %c0_i32_0 = arith.constant 0 : i32
    %c0_i32_1 = arith.constant 0 : i32
    return %c0_i32, %c0_i32_0, %arg0 : i32, i32, i32
  }
}

</mosaic_0001>

<llo_original>
// kernel: tpu_custom_call.1
$region0: #{tpu_custom_call.1}
  #allocation0 [shape = 'u32[]', space=smem, size = 0x4, offset = 0x4, fixed_abs, tag = 'smem constant byte address 0x4 - core index']
  #allocation1 [shape = 'u32[144,128]{1,0:T(1,128)}', space=vmem, size = 0x12000, scoped, tag = 'internal scratch']
  #allocation2 [shape = 'f32[1,16,8]{2,1,0:T(8,128)}', space=vmem, size = 0x2000, scoped, tag = 'scratch operand']
  %s0 = inlined_call_operand.vmem [shape: f32[16,16,8], index: 0, kind: input, shape index: {}]
  %s1 = inlined_call_operand.vmem [shape: f32[8,8], index: 1, kind: input, shape index: {}]
  %s2 = inlined_call_operand.vmem [shape: f32[1,8], index: 2, kind: input, shape index: {}]
  %s3 = inlined_call_operand.vmem [shape: f32[1,8], index: 3, kind: input, shape index: {}]
  %s4 = inlined_call_operand.vmem [shape: f32[16,16,8], index: 4, kind: output, shape index: {}]
  %s5 = sld [smem:[#allocation0]]
  $region54: #{tpu_custom_call.1} parent=0
    _
  %s7 = ssub.s32 1, %s5
  %s8 = scalar_select 0, %s7, %s5
  // Predicated region
  $region2: #{tpu_custom_call.1} parent=0 // pred_check
    _
  $region3: #{tpu_custom_call.1} parent=0 // pred_check_branch
    %10 = sbr.rel (0) target = $region5
  $region4: #{tpu_custom_call.1} parent=0 // pred_region
    _
  $region5: #{tpu_custom_call.1} parent=0 // pred_fallthru
    _
  // Predicated region
  $region6: #{tpu_custom_call.1} parent=0 // pred_check
    _
  $region7: #{tpu_custom_call.1} parent=0 // pred_check_branch
    %12 = sbr.rel (0) target = $region9
  $region8: #{tpu_custom_call.1} parent=0 // pred_region
    _
  $region9: #{tpu_custom_call.1} parent=0 // pred_fallthru
    _
  // Predicated region
  $region10: #{tpu_custom_call.1} parent=0 // pred_check
    _
  $region11: #{tpu_custom_call.1} parent=0 // pred_check_branch
    %14 = sbr.rel (0) target = $region13
  $region12: #{tpu_custom_call.1} parent=0 // pred_region
    _
  $region13: #{tpu_custom_call.1} parent=0 // pred_fallthru
    _
  // Predicated region
  $region14: #{tpu_custom_call.1} parent=0 // pred_check
    _
  $region15: #{tpu_custom_call.1} parent=0 // pred_check_branch
    %16 = sbr.rel (0) target = $region17
  $region16: #{tpu_custom_call.1} parent=0 // pred_region
    _
  $region17: #{tpu_custom_call.1} parent=0 // pred_fallthru
    _
  %v17 = vlaneseq
  %v18 = vshrl.u32 %v17, 7
  %v19 = vadd.s32 %v18, 8
  %v20 = vadd.s32 %v18, 2
  %v21 = vadd.s32 %v19, 2
  %vm22 = vcmp.lt.s32.totalorder %v20, 16
  %v23 = vsel %vm22, %v20, 16
  %vm24 = vcmp.lt.s32.totalorder %v21, 16
  %v25 = vsel %vm24, %v21, 16
  %v26 = vsub.s32 %v18, 1
  %v27 = vsub.s32 %v19, 1
  %vm28 = vcmp.gt.s32.totalorder %v26, 0
  %v29 = vsel %vm28, %v26, 0
  %vm30 = vcmp.gt.s32.totalorder %v27, 0
  %v31 = vsel %vm30, %v27, 0
  %v32 = vsub.s32 %v23, %v29
  %v33 = vsub.s32 %v25, %v31
  %v34 = vcvt.s32.f32 %v32
  %v35 = vcvt.s32.f32 %v33
  %v36 = vrcp.pop %v34
  %v37 = vmul.f32 1.0, %v36
  %v38 = vrcp.pop %v35
  %v39 = vmul.f32 1.0, %v38
  loop: start=0, step=1, limit=16
  $region18: #{tpu_custom_call.1} parent=0 // loop_pre_header
    _
  $region19: #{tpu_custom_call.1} parent=0 // loop_header
    %s41 = sphi 0, %s45
    %p42 = scmp.ge.s32.totalorder %s41, 16
  $region20: #{tpu_custom_call.1} parent=0 // loop_header_branch
    %44 = sbr.rel (%p42) target = $region24
  $region21: #{tpu_custom_call.1} parent=0 // loop_body
    %s46 = sadd.s32 %s41, 4294967295
    %p47 = scmp.gt.s32.totalorder %s46, 0
    %s48 = scalar_select %p47, %s46, 0
    %p49 = scmp.lt.s32.totalorder %s48, 15
    %s50 = scalar_select %p49, %s48, 15
    %s51 = smul.u32 %s50, 16
    %s52 = scalar_lea.vmem %s0, %s51
    %v53 = vld [vmem:[%s52] sm:$0xff]
    %v54 = vld [vmem:[%s52 + $0x8] sm:$0xff]
    %p55 = scmp.ge.s32.totalorder %s46, 0
    %p56 = scmp.lt.s32.totalorder %s46, 16
    %p57 = pnand %p55, %p56
    %p58 = pneg %p57
    %s59 = scalar_select %p58, 1, 0
    %v60 = vstv %s59
    %vm61 = vcmp.eq.s32.totalorder %v60, 1
    %v62 = vsel %vm61, %v53, 0.0
    %v63 = vsel %vm61, %v54, 0.0
    %v64 = vadd.f32 %v62, 0.0
    %v65 = vadd.f32 %v63, 0.0
    %s66 = smul.u32 %s41, 16
    %s67 = scalar_lea.vmem %s0, %s66
    %v68 = vld [vmem:[%s67] sm:$0xff]
    %v69 = vld [vmem:[%s67 + $0x8] sm:$0xff]
    %v70 = vadd.f32 %v64, %v68
    %v71 = vadd.f32 %v65, %v69
    %s72 = sadd.s32 %s41, 1
    %p73 = scmp.gt.s32.totalorder %s72, 0
    %s74 = scalar_select %p73, %s72, 0
    %p75 = scmp.lt.s32.totalorder %s74, 15
    %s76 = scalar_select %p75, %s74, 15
    %s77 = smul.u32 %s76, 16
    %s78 = scalar_lea.vmem %s0, %s77
    %v79 = vld [vmem:[%s78] sm:$0xff]
    %v80 = vld [vmem:[%s78 + $0x8] sm:$0xff]
    %p81 = scmp.ge.s32.totalorder %s72, 0
    %p82 = scmp.lt.s32.totalorder %s72, 16
    %p83 = pnand %p81, %p82
    %p84 = pneg %p83
    %s85 = scalar_select %p84, 1, 0
    %v86 = vstv %s85
    %vm87 = vcmp.eq.s32.totalorder %v86, 1
    %v88 = vsel %vm87, %v79, 0.0
    %v89 = vsel %vm87, %v80, 0.0
    %v90 = vadd.f32 %v70, %v88
    %v91 = vadd.f32 %v71, %v89
    %vm92 = vcmask 64512
    %93 = vst.msk [vmem:[#allocation2] sm:$0xff] %vm92, %v90
    %94 = vst.msk [vmem:[#allocation2 + $0x8] sm:$0xff] %vm92, %v91
    %s95 = scalar_lea.vmem %s4, %s66
    %96 = vst.msk [vmem:[%s95] sm:$0xff] %vm92, 0.0
    %97 = vst.msk [vmem:[%s95 + $0x8] sm:$0xff] %vm92, 0.0
    %v98 = vld [vmem:[#allocation2] sm:$0xff]
    %v99 = vld [vmem:[#allocation2 + $0x8] sm:$0x7f]
    %v100 = vld [vmem:[%s95 + $0x1] sm:$0xff]
    %v101 = vld [vmem:[%s95 + $0x9] sm:$0x7f]
    %v102 = vadd.f32 %v100, %v98
    %v103 = vadd.f32 %v101, %v99
    %104 = vst.msk [vmem:[%s95 + $0x1] sm:$0xff] %vm92, %v102
    %vm105 = vcmask 63488
    %106 = vst.msk [vmem:[%s95 + $0x9] sm:$0x7f] %vm105, %v103
    %v107 = vld [vmem:[#allocation2] sm:$0xff]
    %v108 = vld [vmem:[#allocation2 + $0x8] sm:$0xff]
    %v109 = vld [vmem:[%s95] sm:$0xff]
    %v110 = vld [vmem:[%s95 + $0x8] sm:$0xff]
    %v111 = vadd.f32 %v109, %v107
    %v112 = vadd.f32 %v110, %v108
    %113 = vst.msk [vmem:[%s95] sm:$0xff] %vm92, %v111
    %114 = vst.msk [vmem:[%s95 + $0x8] sm:$0xff] %vm92, %v112
    %v115 = vld [vmem:[#allocation2 + $0x1] sm:$0xff]
    %v116 = vld [vmem:[#allocation2 + $0x9] sm:$0x7f]
    %v117 = vld [vmem:[%s95] sm:$0xff]
    %v118 = vld [vmem:[%s95 + $0x8] sm:$0x7f]
    %v119 = vadd.f32 %v117, %v115
    %v120 = vadd.f32 %v118, %v116
    %121 = vst.msk [vmem:[%s95] sm:$0xff] %vm92, %v119
    %122 = vst.msk [vmem:[%s95 + $0x8] sm:$0x7f] %vm105, %v120
    %s123 = sadd.s32 %s41, 2
    %p124 = scmp.lt.s32.totalorder %s123, 16
    %s125 = scalar_select %p124, %s123, 16
    %s126 = ssub.s32 %s41, 1
    %p127 = scmp.gt.s32.totalorder %s126, 0
    %s128 = scalar_select %p127, %s126, 0
    %s129 = ssub.s32 %s125, %s128
    %s130 = scvt.s32.f32 %s129
    %v131 = vld [vmem:[%s95] sm:$0xff]
    %v132 = vld [vmem:[%s95 + $0x8] sm:$0xff]
    %v133 = vstv %s130
    %v134 = vrcp.pop %v133
    %s135 = vtos %v134
    %v136 = vstv %s135
    %v137 = vmul.f32 %v136, %v37
    %v138 = vmul.f32 %v136, %v39
    %v139 = vmul.f32 %v131, %v137
    %v140 = vmul.f32 %v132, %v138
    %141 = vst.msk [vmem:[%s95] sm:$0xff] %vm92, %v139
    %142 = vst.msk [vmem:[%s95 + $0x8] sm:$0xff] %vm92, %v140
  $region22: #{tpu_custom_call.1} parent=0 // loop_footer
    %s45 = sadd.s32 1, %s41
  $region23: #{tpu_custom_call.1} parent=0 // loop_footer_branch
    %40 = sbr.rel target = $region19
  $region24: #{tpu_custom_call.1} parent=0 // loop_exit
    _
  loop: start=0, step=1, limit=16
  $region25: #{tpu_custom_call.1} parent=0 // loop_pre_header
    _
  $region26: #{tpu_custom_call.1} parent=0 // loop_header
    %s144 = sphi 0, %s148
    %p145 = scmp.ge.s32.totalorder %s144, 16
    %v149 = vphi 0.0, %v155
    %v150 = vphi 0.0, %v156
  $region27: #{tpu_custom_call.1} parent=0 // loop_header_branch
    %147 = sbr.rel (%p145) target = $region31
  $region28: #{tpu_custom_call.1} parent=0 // loop_body
    %s151 = smul.u32 %s144, 16
    %s152 = scalar_lea.vmem %s4, %s151
    %v153 = vld [vmem:[%s152] sm:$0xff]
    %v154 = vld [vmem:[%s152 + $0x8] sm:$0xff]
    %v155 = vadd.f32 %v149, %v153
    %v156 = vadd.f32 %v150, %v154
  $region29: #{tpu_custom_call.1} parent=0 // loop_footer
    %s148 = sadd.s32 1, %s144
  $region30: #{tpu_custom_call.1} parent=0 // loop_footer_branch
    %143 = sbr.rel target = $region26
  $region31: #{tpu_custom_call.1} parent=0 // loop_exit
    _
  %vm157 = vcmask 64512
  %v158 = vsel %vm157, %v149, 0.0
  %v159 = vsel %vm157, %v150, 0.0
  %v160 = vadd.f32 %v158, %v159
  %v161 = vrot.slane %v160, 4
  %v162 = vadd.f32 %v160, %v161
  %v163 = vrot.slane %v162, 2
  %v164 = vadd.f32 %v162, %v163
  %v165 = vrot.slane %v164, 1
  %v166 = vadd.f32 %v164, %v165
  %v167 = vld [vmem:[%s1] sm:$0xff]
  %v169 = vsel %vm157, %v166, 0
  %171 = vmatprep.subr.mxu0 0.0
  %172 = vmatpush1.msra.mxu0 0.0
  %173 = vmatprep.subr.mxu0 0.0
  %174 = vmatpush1.msra.mxu0 0.0
  %175 = vmatprep.subr.mxu0 0.0
  %176 = vmatpush1.msra.mxu0 0.0
  %177 = vmatprep.subr.mxu0 0.0
  %178 = vmatpush1.msra.mxu0 0.0
  %179 = vmatprep.subr.mxu0 0.0
  %180 = vmatpush1.msra.mxu0 0.0
  %181 = vmatprep.subr.mxu0 0.0
  %182 = vmatpush1.msra.mxu0 0.0
  %183 = vmatprep.subr.mxu0 0.0
  %184 = vmatpush1.msra.mxu0 0.0
  %185 = vmatprep.subr.mxu0 0.0
  %186 = vmatpush1.msra.mxu0 0.0
  %187 = vmatprep.subr.mxu0 0.0
  %188 = vmatpush1.msra.mxu0 0.0
  %189 = vmatprep.subr.mxu0 0.0
  %190 = vmatpush1.msra.mxu0 0.0
  %191 = vmatprep.subr.mxu0 0.0
  %192 = vmatpush1.msra.mxu0 0.0
  %193 = vmatprep.subr.mxu0 0.0
  %194 = vmatpush1.msra.mxu0 0.0
  %195 = vmatprep.subr.mxu0 0.0
  %196 = vmatpush1.msra.mxu0 0.0
  %197 = vmatprep.subr.mxu0 0.0
  %198 = vmatpush1.msra.mxu0 0.0
  %199 = vmatprep.subr.mxu0 0.0
  %200 = vmatpush1.msra.mxu0 0.0
  %201 = vmatprep.subr.mxu0 0.0
  %202 = vmatpush1.msra.mxu0 %v167
  %203 = vmatprep.subr.mxu0 0.0
  %204 = vmatpush2.msra.mxu0 0.0
  %205 = vmatprep.subr.mxu0 0.0
  %206 = vmatpush2.msra.mxu0 0.0
  %207 = vmatprep.subr.mxu0 0.0
  %208 = vmatpush2.msra.mxu0 0.0
  %209 = vmatprep.subr.mxu0 0.0
  %210 = vmatpush2.msra.mxu0 0.0
  %211 = vmatprep.subr.mxu0 0.0
  %212 = vmatpush2.msra.mxu0 0.0
  %213 = vmatprep.subr.mxu0 0.0
  %214 = vmatpush2.msra.mxu0 0.0
  %215 = vmatprep.subr.mxu0 0.0
  %216 = vmatpush2.msra.mxu0 0.0
  %217 = vmatprep.subr.mxu0 0.0
  %218 = vmatpush2.msra.mxu0 0.0
  %219 = vmatprep.subr.mxu0 0.0
  %220 = vmatpush2.msra.mxu0 0.0
  %221 = vmatprep.subr.mxu0 0.0
  %222 = vmatpush2.msra.mxu0 0.0
  %223 = vmatprep.subr.mxu0 0.0
  %224 = vmatpush2.msra.mxu0 0.0
  %225 = vmatprep.subr.mxu0 0.0
  %226 = vmatpush2.msra.mxu0 0.0
  %227 = vmatprep.subr.mxu0 0.0
  %228 = vmatpush2.msra.mxu0 0.0
  %229 = vmatprep.subr.mxu0 0.0
  %230 = vmatpush2.msra.mxu0 0.0
  %231 = vmatprep.subr.mxu0 0.0
  %232 = vmatpush2.msra.mxu0 0.0
  %233 = vmatprep.subr.mxu0 0.0
  %234 = vmatpush2.msra.mxu0 0.0
  %235 = vmatprep.mubr.f32.mxu0 0.0
  %236 = vmatmul.mubr.f32.gmra.mxu0 %v169
  %v237 = vpop.f32.mrf.mxu0
  %v238 = vadd.f32 0.0, %v237
  %v239 = vpop.f32.mrf.mxu0
  %240 = vdwg.mxu0
  %v241 = vmul.f32 %v238, 0.001953125
  loop: start=0, step=1, limit=16
  $region32: #{tpu_custom_call.1} parent=0 // loop_pre_header
    _
  $region33: #{tpu_custom_call.1} parent=0 // loop_header
    %s243 = sphi 0, %s247
    %p244 = scmp.ge.s32.totalorder %s243, 16
    %v248 = vphi 0.0, %v262
    %v249 = vphi 0.0, %v263
  $region34: #{tpu_custom_call.1} parent=0 // loop_header_branch
    %246 = sbr.rel (%p244) target = $region38
  $region35: #{tpu_custom_call.1} parent=0 // loop_body
    %s250 = smul.u32 %s243, 16
    %s251 = scalar_lea.vmem %s4, %s250
    %v252 = vld [vmem:[%s251] sm:$0xff]
    %v253 = vld [vmem:[%s251 + $0x8] sm:$0xff]
    %v254 = vlaneseq
    %v255 = vshrl.u32 %v254, 7
    %v256 = vsub.s32 0, %v255
    %v257 = vrot.slane %v241, %v256
    %v258 = vsub.f32 %v252, %v257
    %v259 = vsub.f32 %v253, %v257
    %v260 = vmul.f32 %v258, %v258
    %v261 = vmul.f32 %v259, %v259
    %v262 = vadd.f32 %v248, %v260
    %v263 = vadd.f32 %v249, %v261
  $region36: #{tpu_custom_call.1} parent=0 // loop_footer
    %s247 = sadd.s32 1, %s243
  $region37: #{tpu_custom_call.1} parent=0 // loop_footer_branch
    %242 = sbr.rel target = $region33
  $region38: #{tpu_custom_call.1} parent=0 // loop_exit
    _
  %v264 = vsel %vm157, %v248, 0.0
  %v265 = vsel %vm157, %v249, 0.0
  %v266 = vadd.f32 %v264, %v265
  %v267 = vrot.slane %v266, 4
  %v268 = vadd.f32 %v266, %v267
  %v269 = vrot.slane %v268, 2
  %v270 = vadd.f32 %v268, %v269
  %v271 = vrot.slane %v270, 1
  %v272 = vadd.f32 %v270, %v271
  %v274 = vsel %vm157, %v272, 0
  %276 = vmatprep.subr.mxu0 0.0
  %277 = vmatpush1.msra.mxu0 0.0
  %278 = vmatprep.subr.mxu0 0.0
  %279 = vmatpush1.msra.mxu0 0.0
  %280 = vmatprep.subr.mxu0 0.0
  %281 = vmatpush1.msra.mxu0 0.0
  %282 = vmatprep.subr.mxu0 0.0
  %283 = vmatpush1.msra.mxu0 0.0
  %284 = vmatprep.subr.mxu0 0.0
  %285 = vmatpush1.msra.mxu0 0.0
  %286 = vmatprep.subr.mxu0 0.0
  %287 = vmatpush1.msra.mxu0 0.0
  %288 = vmatprep.subr.mxu0 0.0
  %289 = vmatpush1.msra.mxu0 0.0
  %290 = vmatprep.subr.mxu0 0.0
  %291 = vmatpush1.msra.mxu0 0.0
  %292 = vmatprep.subr.mxu0 0.0
  %293 = vmatpush1.msra.mxu0 0.0
  %294 = vmatprep.subr.mxu0 0.0
  %295 = vmatpush1.msra.mxu0 0.0
  %296 = vmatprep.subr.mxu0 0.0
  %297 = vmatpush1.msra.mxu0 0.0
  %298 = vmatprep.subr.mxu0 0.0
  %299 = vmatpush1.msra.mxu0 0.0
  %300 = vmatprep.subr.mxu0 0.0
  %301 = vmatpush1.msra.mxu0 0.0
  %302 = vmatprep.subr.mxu0 0.0
  %303 = vmatpush1.msra.mxu0 0.0
  %304 = vmatprep.subr.mxu0 0.0
  %305 = vmatpush1.msra.mxu0 0.0
  %306 = vmatprep.subr.mxu0 0.0
  %307 = vmatpush1.msra.mxu0 %v167
  %308 = vmatprep.subr.mxu0 0.0
  %309 = vmatpush2.msra.mxu0 0.0
  %310 = vmatprep.subr.mxu0 0.0
  %311 = vmatpush2.msra.mxu0 0.0
  %312 = vmatprep.subr.mxu0 0.0
  %313 = vmatpush2.msra.mxu0 0.0
  %314 = vmatprep.subr.mxu0 0.0
  %315 = vmatpush2.msra.mxu0 0.0
  %316 = vmatprep.subr.mxu0 0.0
  %317 = vmatpush2.msra.mxu0 0.0
  %318 = vmatprep.subr.mxu0 0.0
  %319 = vmatpush2.msra.mxu0 0.0
  %320 = vmatprep.subr.mxu0 0.0
  %321 = vmatpush2.msra.mxu0 0.0
  %322 = vmatprep.subr.mxu0 0.0
  %323 = vmatpush2.msra.mxu0 0.0
  %324 = vmatprep.subr.mxu0 0.0
  %325 = vmatpush2.msra.mxu0 0.0
  %326 = vmatprep.subr.mxu0 0.0
  %327 = vmatpush2.msra.mxu0 0.0
  %328 = vmatprep.subr.mxu0 0.0
  %329 = vmatpush2.msra.mxu0 0.0
  %330 = vmatprep.subr.mxu0 0.0
  %331 = vmatpush2.msra.mxu0 0.0
  %332 = vmatprep.subr.mxu0 0.0
  %333 = vmatpush2.msra.mxu0 0.0
  %334 = vmatprep.subr.mxu0 0.0
  %335 = vmatpush2.msra.mxu0 0.0
  %336 = vmatprep.subr.mxu0 0.0
  %337 = vmatpush2.msra.mxu0 0.0
  %338 = vmatprep.subr.mxu0 0.0
  %339 = vmatpush2.msra.mxu0 0.0
  %340 = vmatprep.mubr.f32.mxu0 0.0
  %341 = vmatmul.mubr.f32.gmra.mxu0 %v274
  %v342 = vpop.f32.mrf.mxu0
  %v343 = vadd.f32 0.0, %v342
  %v344 = vpop.f32.mrf.mxu0
  %345 = vdwg.mxu0
  %v346 = vmul.f32 %v343, 0.001953125
  %v347 = vmax.f32 %v346, 0.0
  %v348 = vld [vmem:[%s2] sm:$0x1]
  %v349 = vadd.f32 %v347, 1e-05
  %v350 = vrsqrt.pop %v349
  %v351 = vmul.f32 %v348, %v350
  %v352 = vld [vmem:[%s3] sm:$0x1]
  %v353 = vmul.f32 %v241, %v351
  %v354 = vsub.f32 %v352, %v353
  loop: start=0, step=1, limit=16
  $region39: #{tpu_custom_call.1} parent=0 // loop_pre_header
    _
  $region40: #{tpu_custom_call.1} parent=0 // loop_header
    %s356 = sphi 0, %s360
    %p357 = scmp.ge.s32.totalorder %s356, 16
  $region41: #{tpu_custom_call.1} parent=0 // loop_header_branch
    %359 = sbr.rel (%p357) target = $region45
  $region42: #{tpu_custom_call.1} parent=0 // loop_body
    %s361 = smul.u32 %s356, 16
    %s362 = scalar_lea.vmem %s4, %s361
    %v363 = vld [vmem:[%s362] sm:$0xff]
    %v364 = vld [vmem:[%s362 + $0x8] sm:$0xff]
    %v366 = vlaneseq
    %v367 = vshrl.u32 %v366, 7
    %v368 = vsub.s32 0, %v367
    %v369 = vrot.slane %v351, %v368
    %v371 = vmul.f32 %v363, %v369
    %v372 = vmul.f32 %v364, %v369
    %v374 = vlaneseq
    %v375 = vshrl.u32 %v374, 7
    %v376 = vsub.s32 0, %v375
    %v377 = vrot.slane %v354, %v376
    %v379 = vadd.f32 %v371, %v377
    %v380 = vadd.f32 %v372, %v377
    %381 = vst.msk [vmem:[%s362] sm:$0xff] %vm157, %v379
    %382 = vst.msk [vmem:[%s362 + $0x8] sm:$0xff] %vm157, %v380
  $region43: #{tpu_custom_call.1} parent=0 // loop_footer
    %s360 = sadd.s32 1, %s356
  $region44: #{tpu_custom_call.1} parent=0 // loop_footer_branch
    %355 = sbr.rel target = $region40
  $region45: #{tpu_custom_call.1} parent=0 // loop_exit
    _
  // Predicated region
  $region46: #{tpu_custom_call.1} parent=0 // pred_check
    _
  $region47: #{tpu_custom_call.1} parent=0 // pred_check_branch
    %384 = sbr.rel (0) target = $region49
  $region48: #{tpu_custom_call.1} parent=0 // pred_region
    _
  $region49: #{tpu_custom_call.1} parent=0 // pred_fallthru
    _
  // Predicated region
  $region50: #{tpu_custom_call.1} parent=0 // pred_check
    _
  $region51: #{tpu_custom_call.1} parent=0 // pred_check_branch
    %386 = sbr.rel (0) target = $region53
  $region52: #{tpu_custom_call.1} parent=0 // pred_region
    _
  $region53: #{tpu_custom_call.1} parent=0 // pred_fallthru
    _

</llo_original>
